<compile_context>
chip_gen: v6e
topology: v6e:2x2x1
jax: 0.10.0
libtpu: 0.0.40
codegen_flags: <defaults>
</compile_context>

<pallas_src>
import jax
import jax.numpy as jnp
from jax import lax
from jax.experimental import pallas as pl
from jax.experimental.pallas import tpu as pltpu

_LANE = 128


def myloss_kernel(x_ref, tgt_ref, out_ref):
    """x_ref: (C, TB) f32 (batch on lanes), tgt_ref: (K, TB) i32,
    out_ref: (1, TB) f32 per-sample sums sum_c(t_score / ls)."""
    x = x_ref[...]                                   # (C, TB) f32
    tgt = tgt_ref[...]                               # (K, TB) i32
    C, TB = x.shape
    K = tgt.shape[0]

    # Numerically stable log-sigmoid: min(x,0) - log1p(exp(-|x|))  (2 EUP ops)
    ls = jnp.minimum(x, 0.0) - jnp.log1p(jnp.exp(-jnp.abs(x)))

    # One-hot scatter mask along the cluster (sublane) axis:
    # mask[c, b] = 1 iff c appears in targets[b, :]
    row_ids = lax.broadcasted_iota(jnp.int32, (C, TB), 0)
    mask = jnp.zeros((C, TB), dtype=jnp.bool_)
    for j in range(K):                               # static unroll (K small)
        mask = jnp.logical_or(mask, row_ids == tgt[j:j + 1, :])

    # t_score = clamp_min( sum_c(ls * mask), 1e-6 )  -> (1, TB)
    t_score = jnp.maximum(
        jnp.sum(jnp.where(mask, ls, 0.0), axis=0, keepdims=True),
        jnp.float32(1e-6),
    )

    # sum_c(t_score / ls) == t_score * sum_c(1/ls): factor the (1,TB) t_score
    # out of the per-element divide (one reciprocal per element, one mul per
    # sample).  f32 1/x lowers to the HW reciprocal path on TPU.
    inv_sum = jnp.sum(1.0 / ls, axis=0, keepdims=True)   # (1, TB)
    out_ref[...] = t_score * inv_sum                      # per-sample sums


def myloss(inputs, targets, *, tb=None):
    """inputs: (B, C, 1) float, targets: (B, K) int -> scalar float32."""
    x = inputs[..., 0].astype(jnp.float32)           # squeeze(2) — glue, (B, C)
    tgt = targets.astype(jnp.int32)                  # (B, K)
    B, C = x.shape
    K = tgt.shape[1]

    # Batch tile (lane) size: multiple of 128, capped so 2x double-buffered
    # inputs + output stay well under every generation's scoped-VMEM default.
    if tb is None:
        budget = 8 * 1024 * 1024
        tb_max = (budget // (2 * 4 * (C + K + 1))) // _LANE * _LANE
        tb = max(_LANE, min(1024, tb_max))
    tb = min(tb, pl.cdiv(B, _LANE) * _LANE)           # don't over-pad tiny B
    b_pad = pl.cdiv(B, tb) * tb
    num_tiles = b_pad // tb

    # Pad the batch and put it on the lane axis (C on sublanes).
    x_t = jnp.pad(x, ((0, b_pad - B), (0, 0))).T      # (C, b_pad)
    t_t = jnp.pad(tgt, ((0, b_pad - B), (0, 0))).T    # (K, b_pad)

    per_b = pl.pallas_call(
        myloss_kernel,
        out_shape=jax.ShapeDtypeStruct((1, b_pad), jnp.float32),
        grid=(num_tiles,),
        in_specs=[
            pl.BlockSpec((C, tb), lambda i: (0, i)),
            pl.BlockSpec((K, tb), lambda i: (0, i)),
        ],
        out_specs=pl.BlockSpec((1, tb), lambda i: (0, i)),
        compiler_params=pltpu.CompilerParams(
            dimension_semantics=("parallel",),
        ),
        cost_estimate=pl.CostEstimate(
            flops=10 * b_pad * C,
            transcendentals=3 * b_pad * C,
            bytes_accessed=4 * b_pad * (C + K + 1),
        ),
    )(x_t, t_t)

    # Final reduce over the valid batch entries (padded rows are dropped).
    return -(jnp.sum(per_b[0, :B]) / jnp.float32(B))


def myloss_ref(inputs, targets):
    """Pure-JAX reference mirroring the PyTorch code."""
    ls = jax.nn.log_sigmoid(inputs[..., 0].astype(jnp.float32))   # (B, C)
    B, C = ls.shape
    onehot = (jnp.arange(C)[None, None, :] == targets[:, :, None]).any(axis=1)
    onehot = onehot.astype(jnp.float32)
    t_score = jnp.maximum(jnp.sum(ls * onehot, axis=1, keepdims=True),
                          jnp.float32(1e-6))
    return -jnp.mean(jnp.sum(t_score / ls, axis=1))


if __name__ == "__main__":
    B, C, K = 4, 16, 3
    key = jax.random.PRNGKey(0)
    k1, k2 = jax.random.split(key)
    # "centrality scores after a relu layer" -> nonnegative
    inputs = jax.nn.relu(jax.random.normal(k1, (B, C, 1), dtype=jnp.float32))
    targets = jax.random.randint(k2, (B, K), 0, C, dtype=jnp.int32)

    res = myloss(inputs, targets)
    jax.block_until_ready(res)

    ref = myloss_ref(inputs, targets)
    assert jnp.allclose(res, ref, rtol=1e-5, atol=1e-6), (res, ref)

    print("KERNEL_OK")
</pallas_src>

<mosaic_0001>
module attributes {stable_mosaic.version = 11 : i64} {
  func.func @myloss_kernel(%arg0: i32, %arg1: memref<16x128xf32, #tpu.memory_space<vmem>>, %arg2: memref<3x128xi32, #tpu.memory_space<vmem>>, %arg3: memref<1x128xf32, #tpu.memory_space<vmem>>) attributes {dimension_semantics = [#tpu.dimension_semantics<parallel>], iteration_bounds = array<i64: 1>, scalar_prefetch = 0 : i64, scratch_operands = 0 : i64, tpu.core_type = #tpu.core_type<tc>, window_params = [{transform_indices = @transform_0, window_bounds = array<i64: 16, 128>}, {transform_indices = @transform_1, window_bounds = array<i64: 3, 128>}, {transform_indices = @transform_2, window_bounds = array<i64: 1, 128>}]} {
    %c0 = arith.constant 0 : index
    %c0_0 = arith.constant 0 : index
    %0 = vector.load %arg1[%c0, %c0_0] : memref<16x128xf32, #tpu.memory_space<vmem>>, vector<16x128xf32>
    %c0_1 = arith.constant 0 : index
    %c0_2 = arith.constant 0 : index
    %1 = vector.load %arg2[%c0_1, %c0_2] : memref<3x128xi32, #tpu.memory_space<vmem>>, vector<3x128xi32>
    %cst = arith.constant 0.000000e+00 : f32
    %2 = vector.broadcast %cst : f32 to vector<16x128xf32>
    %3 = arith.minimumf %0, %2 : vector<16x128xf32>
    %4 = math.absf %0 : vector<16x128xf32>
    %cst_3 = arith.constant 0.000000e+00 : f32
    %5 = vector.broadcast %cst_3 : f32 to vector<16x128xf32>
    %6 = arith.subf %5, %4 : vector<16x128xf32>
    %7 = math.exp %6 : vector<16x128xf32>
    %8 = math.log1p %7 : vector<16x128xf32>
    %9 = arith.subf %3, %8 : vector<16x128xf32>
    %10 = tpu.iota {dimensions = array<i32: 0>} : vector<16x128xi32>
    %false = arith.constant false
    %11 = vector.broadcast %false : i1 to vector<16x128xi1>
    %12 = vector.extract_strided_slice %1 {offsets = [0, 0], sizes = [1, 128], strides = [1, 1]} : vector<3x128xi32> to vector<1x128xi32>
    %13 = vector.broadcast %12 : vector<1x128xi32> to vector<16x128xi32>
    %14 = arith.cmpi eq, %10, %13 : vector<16x128xi32>
    %15 = arith.ori %11, %14 : vector<16x128xi1>
    %16 = vector.extract_strided_slice %1 {offsets = [1, 0], sizes = [1, 128], strides = [1, 1]} : vector<3x128xi32> to vector<1x128xi32>
    %17 = vector.broadcast %16 : vector<1x128xi32> to vector<16x128xi32>
    %18 = arith.cmpi eq, %10, %17 : vector<16x128xi32>
    %19 = arith.ori %15, %18 : vector<16x128xi1>
    %20 = vector.extract_strided_slice %1 {offsets = [2, 0], sizes = [1, 128], strides = [1, 1]} : vector<3x128xi32> to vector<1x128xi32>
    %21 = vector.broadcast %20 : vector<1x128xi32> to vector<16x128xi32>
    %22 = arith.cmpi eq, %10, %21 : vector<16x128xi32>
    %23 = arith.ori %19, %22 : vector<16x128xi1>
    %cst_4 = arith.constant 0.000000e+00 : f32
    %24 = vector.broadcast %cst_4 : f32 to vector<16x128xf32>
    %25 = arith.select %23, %9, %24 : vector<16x128xi1>, vector<16x128xf32>
    %cst_5 = arith.constant dense<0.000000e+00> : vector<128xf32>
    %26 = vector.multi_reduction <add>, %25, %cst_5 [0] : vector<16x128xf32> to vector<128xf32>
    %27 = vector.shape_cast %26 : vector<128xf32> to vector<1x128xf32>
    %cst_6 = arith.constant 9.99999997E-7 : f32
    %28 = vector.broadcast %cst_6 : f32 to vector<1x128xf32>
    %29 = arith.maximumf %27, %28 : vector<1x128xf32>
    %cst_7 = arith.constant 1.000000e+00 : f32
    %30 = vector.broadcast %cst_7 : f32 to vector<16x128xf32>
    %31 = arith.divf %30, %9 : vector<16x128xf32>
    %cst_8 = arith.constant dense<0.000000e+00> : vector<128xf32>
    %32 = vector.multi_reduction <add>, %31, %cst_8 [0] : vector<16x128xf32> to vector<128xf32>
    %33 = vector.shape_cast %32 : vector<128xf32> to vector<1x128xf32>
    %34 = arith.mulf %29, %33 : vector<1x128xf32>
    %c0_9 = arith.constant 0 : index
    %c0_10 = arith.constant 0 : index
    %35 = vector.load %arg3[%c0_9, %c0_10] : memref<1x128xf32, #tpu.memory_space<vmem>>, vector<1x128xf32>
    tpu.vector_store %arg3[%c0_9, %c0_10], %34 {strides = array<i32>} : memref<1x128xf32, #tpu.memory_space<vmem>>, vector<1x128xf32>,
    return
  }
  func.func @transform_0(%arg0: i32) -> (i32, i32) {
    %c0_i32 = arith.constant 0 : i32
    %c0_i32_0 = arith.constant 0 : i32
    return %c0_i32, %arg0 : i32, i32
  }
  func.func @transform_1(%arg0: i32) -> (i32, i32) {
    %c0_i32 = arith.constant 0 : i32
    %c0_i32_0 = arith.constant 0 : i32
    return %c0_i32, %arg0 : i32, i32
  }
  func.func @transform_2(%arg0: i32) -> (i32, i32) {
    %c0_i32 = arith.constant 0 : i32
    %c0_i32_0 = arith.constant 0 : i32
    return %c0_i32, %arg0 : i32, i32
  }
}

</mosaic_0001>

<llo_original>
// kernel: tpu_custom_call.1
$region0: #{tpu_custom_call.1}
  #allocation0 [shape = 'u32[]', space=smem, size = 0x4, offset = 0x4, fixed_abs, tag = 'smem constant byte address 0x4 - core index']
  #allocation1 [shape = 'u32[144,128]{1,0:T(1,128)}', space=vmem, size = 0x12000, scoped, tag = 'internal scratch']
  %s0 = inlined_call_operand.hbm [shape: f32[16,128], index: 0, kind: input, shape index: {}]
  %s1 = inlined_call_operand.hbm [shape: s32[3,128], index: 1, kind: input, shape index: {}]
  %s2 = inlined_call_operand.hbm [shape: f32[1,128], index: 2, kind: output, shape index: {}]
  %s3 = sld [smem:[#allocation0]]
  $region26: #{tpu_custom_call.1} parent=0
    _
  %s5 = ssub.s32 1, %s3
  %s6 = scalar_select 0, %s5, %s3
  $region1: #{tpu_custom_call.1} parent=0
    #allocation2 [shape = 'u8[8192]{0}', space=vmem, size = 0x2000, scoped, tag = 'input window, operand 0, single buffered']
    #allocation3 [shape = 's32[1]{0}', space=sflag, size = 0x4, scoped, tag = 'scoped memory for tpu_custom_call.1']
    #allocation4 [shape = 's32[1]{0}', space=sflag, size = 0x4, scoped, tag = 'scoped memory for tpu_custom_call.1']
    #allocation5 [shape = 'u8[2048]{0}', space=vmem, size = 0x800, scoped, tag = 'input window, operand 1, single buffered']
    #allocation6 [shape = 's32[1]{0}', space=sflag, size = 0x4, scoped, tag = 'scoped memory for tpu_custom_call.1']
    #allocation7 [shape = 'u8[512]{0}', space=vmem, size = 0x400, scoped, tag = 'output window, operand 0, single buffered']
    %7 = vsyncpa [#allocation3], 0
    %8 = vsyncpa [#allocation6], 0
    %9 = vsyncpa [#allocation4], 0
    // Predicated region
    $region2: #{tpu_custom_call.1} parent=1 // pred_check
      _
    $region3: #{tpu_custom_call.1} parent=1 // pred_check_branch
      %11 = sbr.rel (0) target = $region5
    $region4: #{tpu_custom_call.1} parent=1 // pred_region
      %s13 = ssub.s32 256, 256
      %14 = vsyncadd [#allocation3], %s13
      %s15 = sshll.u32 [#allocation2], 4
      %s16 = int_to_ptr.vmem [resolvable:$true] %s15
      %21 = dma.hbm_to_vmem [thread:$0]  %s0, 256, %s16, [#allocation3], 128, 128, 8
    $region5: #{tpu_custom_call.1} parent=1 // pred_fallthru
      _
    // Predicated region
    $region6: #{tpu_custom_call.1} parent=1 // pred_check
      _
    $region7: #{tpu_custom_call.1} parent=1 // pred_check_branch
      %23 = sbr.rel (0) target = $region9
    $region8: #{tpu_custom_call.1} parent=1 // pred_region
      %s25 = ssub.s32 64, 64
      %26 = vsyncadd [#allocation6], %s25
      %s28 = sshll.u32 [#allocation5], 4
      %s29 = int_to_ptr.vmem [resolvable:$true] %s28
      %31 = dma.hbm_to_vmem [thread:$0]  %s1, 64, %s29, [#allocation6]
    $region9: #{tpu_custom_call.1} parent=1 // pred_fallthru
      _
    // Predicated region
    $region10: #{tpu_custom_call.1} parent=1 // pred_check
      _
    $region11: #{tpu_custom_call.1} parent=1 // pred_check_branch
      %33 = sbr.rel (0) target = $region13
    $region12: #{tpu_custom_call.1} parent=1 // pred_region
      %34 = dma.done [#allocation3], 256
    $region13: #{tpu_custom_call.1} parent=1 // pred_fallthru
      _
    // Predicated region
    $region14: #{tpu_custom_call.1} parent=1 // pred_check
      _
    $region15: #{tpu_custom_call.1} parent=1 // pred_check_branch
      %36 = sbr.rel (0) target = $region17
    $region16: #{tpu_custom_call.1} parent=1 // pred_region
      %37 = dma.done [#allocation6], 64
    $region17: #{tpu_custom_call.1} parent=1 // pred_fallthru
      _
    %v38 = vld [vmem:[#allocation2] sm:$0xff]
    %v39 = vld [vmem:[#allocation2 + $0x8] sm:$0xff]
    %v40 = vld [vmem:[#allocation5] sm:$0x7]
    %v41 = vmin.f32 %v38, 0.0
    %v42 = vmin.f32 %v39, 0.0
    %v43 = vand.u32 2147483647, %v38
    %v44 = vand.u32 2147483647, %v39
    %v45 = vsub.f32 0.0, %v43
    %v46 = vsub.f32 0.0, %v44
    %v47 = vmul.f32 %v45, 1.442695
    %v48 = vpow.pop %v47
    %v49 = vmul.f32 %v46, 1.442695
    %v50 = vpow.pop %v49
    %v51 = vadd.f32 %v48, 1.0
    %v52 = vlog2.pop %v51
    %v53 = vmul.f32 %v52, 0.6931472
    %v54 = vmul.f32 -0.5, %v48
    %v55 = vadd.f32 %v54, 1.0
    %v56 = vmul.f32 %v55, %v48
    %v57 = vand.u32 2147483647, %v48
    %vm58 = vcmp.lt.f32.partialorder %v57, 0.0004427343
    %v59 = vsel %vm58, %v56, %v53
    %v60 = vadd.f32 %v50, 1.0
    %v61 = vlog2.pop %v60
    %v62 = vmul.f32 %v61, 0.6931472
    %v63 = vmul.f32 -0.5, %v50
    %v64 = vadd.f32 %v63, 1.0
    %v65 = vmul.f32 %v64, %v50
    %v66 = vand.u32 2147483647, %v50
    %vm67 = vcmp.lt.f32.partialorder %v66, 0.0004427343
    %v68 = vsel %vm67, %v65, %v62
    %v69 = vsub.f32 %v41, %v59
    %v70 = vsub.f32 %v42, %v68
    %v71 = vlaneseq
    %v72 = vshrl.u32 %v71, 7
    %v73 = vadd.s32 %v72, 8
    %v74 = vlaneseq
    %v75 = vshrl.u32 %v74, 7
    %v76 = vsub.s32 0, %v75
    %v77 = vrot.slane %v40, %v76
    %vm78 = vcmp.eq.s32.totalorder %v72, %v77
    %vm79 = vcmp.eq.s32.totalorder %v73, %v77
    %v80 = vlaneseq
    %v81 = vshrl.u32 %v80, 7
    %v82 = vsub.s32 1, %v81
    %v83 = vrot.slane %v40, %v82
    %vm84 = vcmp.eq.s32.totalorder %v72, %v83
    %vm85 = vcmp.eq.s32.totalorder %v73, %v83
    %vm86 = vmor %vm78, %vm84
    %vm87 = vmor %vm79, %vm85
    %v88 = vlaneseq
    %v89 = vshrl.u32 %v88, 7
    %v90 = vsub.s32 2, %v89
    %v91 = vrot.slane %v40, %v90
    %vm92 = vcmp.eq.s32.totalorder %v72, %v91
    %vm93 = vcmp.eq.s32.totalorder %v73, %v91
    %vm94 = vmor %vm86, %vm92
    %vm95 = vmor %vm87, %vm93
    %v96 = vsel %vm94, %v69, 0.0
    %v97 = vsel %vm95, %v70, 0.0
    %v98 = vadd.f32 %v96, %v97
    %v99 = vrot.slane %v98, 4
    %v100 = vadd.f32 %v98, %v99
    %v101 = vrot.slane %v100, 2
    %v102 = vadd.f32 %v100, %v101
    %v103 = vrot.slane %v102, 1
    %v104 = vadd.f32 %v102, %v103
    %v105 = vmax.f32 %v104, 1e-06
    %v106 = vrcp.pop %v69
    %v107 = vmul.f32 1.0, %v106
    %v108 = vrcp.pop %v70
    %v109 = vmul.f32 1.0, %v108
    %v110 = vadd.f32 %v107, %v109
    %v111 = vrot.slane %v110, 4
    %v112 = vadd.f32 %v110, %v111
    %v113 = vrot.slane %v112, 2
    %v114 = vadd.f32 %v112, %v113
    %v115 = vrot.slane %v114, 1
    %v116 = vadd.f32 %v114, %v115
    %v117 = vmul.f32 %v105, %v116
    %118 = vst [vmem:[#allocation7] sm:$0x1] %v117
    // Predicated region
    $region18: #{tpu_custom_call.1} parent=1 // pred_check
      _
    $region19: #{tpu_custom_call.1} parent=1 // pred_check_branch
      %120 = sbr.rel (0) target = $region21
    $region20: #{tpu_custom_call.1} parent=1 // pred_region
      %s122 = ssub.s32 16, 16
      %123 = vsyncadd [#allocation4], %s122
      %s125 = sshll.u32 [#allocation7], 4
      %s126 = int_to_ptr.vmem [resolvable:$true] %s125
      %128 = dma.vmem_to_hbm [thread:$0]  %s126, 16, %s2, [#allocation4]
    $region21: #{tpu_custom_call.1} parent=1 // pred_fallthru
      _
    // Predicated region
    $region22: #{tpu_custom_call.1} parent=1 // pred_check
      _
    $region23: #{tpu_custom_call.1} parent=1 // pred_check_branch
      %130 = sbr.rel (0) target = $region25
    $region24: #{tpu_custom_call.1} parent=1 // pred_region
      %131 = dma.done [#allocation4], 16
    $region25: #{tpu_custom_call.1} parent=1 // pred_fallthru
      _
    %132 = vsyncpa [#allocation3], 1
    %133 = vsyncpa [#allocation6], 1
    %134 = vsyncpa [#allocation4], 1

</llo_original>
